<compile_context>
chip_gen: v6e
topology: v6e:2x2x1
jax: 0.10.0
libtpu: 0.0.40
codegen_flags: <defaults>
</compile_context>

<pallas_src>
import functools

import jax
import jax.numpy as jnp
from jax.experimental import pallas as pl
from jax.experimental.pallas import tpu as pltpu


LN_EPS = 1e-5   # nn.LayerNorm default
LANE = 128
SUBLANE = 8


def _round_up(x, m):
    return ((x + m - 1) // m) * m


def _make_adapter_kernel(d_true, d_pad):
    """Build the kernel with static knowledge of the true vs padded feature dim."""
    need_mask = d_pad != d_true
    inv_d = 1.0 / float(d_true)

    def kernel(x_ref, g_ref, beta_ref, wd_ref, bd_ref, wu_ref, bu_ref, s_ref,
               o_ref):
        # ---- LayerNorm over the true feature lanes, f32 math ----
        x = x_ref[...].astype(jnp.float32)                    # (tm, D_pad)
        g = g_ref[...].astype(jnp.float32)                    # (1, D_pad), 0 in pad lanes
        beta = beta_ref[...].astype(jnp.float32)               # (1, D_pad), 0 in pad lanes

        # padded x lanes are zero, so a plain sum / D_true gives the true mean.
        mean = jnp.sum(x, axis=-1, keepdims=True) * inv_d
        xc = x - mean
        if need_mask:
            lane = jax.lax.broadcasted_iota(jnp.int32, xc.shape, 1)
            xc_stats = jnp.where(lane < d_true, xc, 0.0)
        else:
            xc_stats = xc
        var = jnp.sum(xc_stats * xc_stats, axis=-1, keepdims=True) * inv_d
        # gamma/beta are zero in padded lanes -> xn is exactly 0 there.
        xn = xc * jax.lax.rsqrt(var + LN_EPS) * g + beta

        # ---- down projection + ReLU (MXU, f32 accumulation) ----
        down = jnp.dot(xn.astype(wd_ref.dtype), wd_ref[...],
                       preferred_element_type=jnp.float32)
        down = down + bd_ref[...].astype(jnp.float32)
        down = jnp.maximum(down, 0.0)
        # TODO(synk): dropout is p=0.0 in this adapter config -> no-op; omitted.

        # ---- up projection + learnable scalar (scalar lives in SMEM) ----
        up = jnp.dot(down.astype(wu_ref.dtype), wu_ref[...],
                     preferred_element_type=jnp.float32)
        up = up + bu_ref[...].astype(jnp.float32)
        o_ref[...] = (up * s_ref[0]).astype(o_ref.dtype)

    return kernel


def adapter_forward(x, ln_gamma, ln_beta, w_down, b_down, w_up, b_up, scale,
                    *, tm=512):
    """x: (B, N, D). Linear weights stored as (in_features, out_features)."""
    B, N, D = x.shape
    Dn = w_down.shape[1]
    M = B * N
    itemsize = jnp.dtype(x.dtype).itemsize

    # ---- lane-dense padding of feature / bottleneck dims ----
    D_pad = _round_up(D, LANE)
    Dn_pad = _round_up(Dn, LANE)

    # ---- pick the row tile: big, but within a conservative VMEM tile budget ----
    # double-buffered x + out tiles plus f32 temporaries (xn, down, up).
    per_row_bytes = 4 * D_pad * itemsize + 4 * (2 * D_pad + Dn_pad)
    budget = 12 * 1024 * 1024
    max_tm = max(SUBLANE, (budget // per_row_bytes) // SUBLANE * SUBLANE)
    tm_eff = min(max(SUBLANE, (tm // SUBLANE) * SUBLANE),
                 max_tm,
                 _round_up(M, SUBLANE))
    M_pad = _round_up(M, tm_eff)

    # ---- zero-pad operands (padding rows/lanes are benign and sliced off) ----
    x2d = jnp.pad(x.reshape(M, D), ((0, M_pad - M), (0, D_pad - D)))
    g2d = jnp.pad(ln_gamma.reshape(1, D), ((0, 0), (0, D_pad - D)))
    beta2d = jnp.pad(ln_beta.reshape(1, D), ((0, 0), (0, D_pad - D)))
    wd = jnp.pad(w_down, ((0, D_pad - D), (0, Dn_pad - Dn)))
    bd2d = jnp.pad(b_down.reshape(1, Dn), ((0, 0), (0, Dn_pad - Dn)))
    wu = jnp.pad(w_up, ((0, Dn_pad - Dn), (0, D_pad - D)))
    bu2d = jnp.pad(b_up.reshape(1, D), ((0, 0), (0, D_pad - D)))
    s1 = scale.reshape(1).astype(jnp.float32)

    kernel = _make_adapter_kernel(D, D_pad)
    grid = (M_pad // tm_eff,)

    cost = pl.CostEstimate(
        flops=int(2 * M_pad * D_pad * Dn_pad * 2 + 8 * M_pad * D_pad),
        transcendentals=int(M_pad),
        bytes_accessed=int(2 * M_pad * D_pad * itemsize
                           + (wd.size + wu.size) * 4
                           + 4 * D_pad * 4 + Dn_pad * 4),
    )

    out = pl.pallas_call(
        kernel,
        out_shape=jax.ShapeDtypeStruct((M_pad, D_pad), x.dtype),
        grid_spec=pltpu.PrefetchScalarGridSpec(
            num_scalar_prefetch=0,
            grid=grid,
            in_specs=[
                pl.BlockSpec((tm_eff, D_pad), lambda i: (i, 0)),   # x rows
                pl.BlockSpec((1, D_pad), lambda i: (0, 0)),        # ln gamma
                pl.BlockSpec((1, D_pad), lambda i: (0, 0)),        # ln beta
                pl.BlockSpec((D_pad, Dn_pad), lambda i: (0, 0)),   # W_down
                pl.BlockSpec((1, Dn_pad), lambda i: (0, 0)),       # b_down
                pl.BlockSpec((Dn_pad, D_pad), lambda i: (0, 0)),   # W_up
                pl.BlockSpec((1, D_pad), lambda i: (0, 0)),        # b_up
                pl.BlockSpec(memory_space=pltpu.MemorySpace.SMEM),  # scale scalar
            ],
            out_specs=pl.BlockSpec((tm_eff, D_pad), lambda i: (i, 0)),
        ),
        compiler_params=pltpu.CompilerParams(
            dimension_semantics=("parallel",)),
        cost_estimate=cost,
    )(x2d, g2d, beta2d, wd, bd2d, wu, bu2d, s1)

    return out[:M, :D].reshape(B, N, D)


def reference_forward(x, ln_gamma, ln_beta, w_down, b_down, w_up, b_up, scale):
    xf = x.astype(jnp.float32)
    mean = jnp.mean(xf, axis=-1, keepdims=True)
    var = jnp.mean((xf - mean) ** 2, axis=-1, keepdims=True)
    xn = (xf - mean) / jnp.sqrt(var + LN_EPS) * ln_gamma + ln_beta
    down = jnp.maximum(xn @ w_down + b_down, 0.0)
    up = down @ w_up + b_up
    return (up * scale).astype(x.dtype)


if __name__ == "__main__":
    # Small shapes: batch=2, seq=8, d_model=32, bottleneck=16
    B, N, D, Dn = 2, 8, 32, 16

    key = jax.random.PRNGKey(0)
    kx, kwd, kbd, kwu, kbu = jax.random.split(key, 5)

    x = jax.random.normal(kx, (B, N, D), dtype=jnp.float32)

    # Deterministic parameter init (shapes match nn.Linear / nn.LayerNorm).
    ln_gamma = jnp.ones((D,), jnp.float32)
    ln_beta = jnp.zeros((D,), jnp.float32)
    lim_d = 1.0 / (D ** 0.5)
    lim_u = 1.0 / (Dn ** 0.5)
    # Linear weights stored as (in_features, out_features) = torch weight.T
    w_down = jax.random.uniform(kwd, (D, Dn), jnp.float32, -lim_d, lim_d)
    b_down = jax.random.uniform(kbd, (Dn,), jnp.float32, -lim_d, lim_d)
    w_up = jax.random.uniform(kwu, (Dn, D), jnp.float32, -lim_u, lim_u)
    b_up = jax.random.uniform(kbu, (D,), jnp.float32, -lim_u, lim_u)
    scale = jnp.ones((1,), jnp.float32)  # learnable_scalar init = ones(1)

    out = adapter_forward(x, ln_gamma, ln_beta, w_down, b_down, w_up, b_up, scale)
    out = jax.block_until_ready(out)

    ref = reference_forward(x, ln_gamma, ln_beta, w_down, b_down, w_up, b_up, scale)
    assert out.shape == (B, N, D)
    assert jnp.allclose(out, ref, atol=1e-4, rtol=1e-4)

    print("KERNEL_OK")
</pallas_src>

<mosaic_0001>
module attributes {stable_mosaic.version = 11 : i64} {
  func.func @kernel(%arg0: i32, %arg1: memref<16x128xf32, #tpu.memory_space<vmem>>, %arg2: memref<1x128xf32, #tpu.memory_space<vmem>>, %arg3: memref<1x128xf32, #tpu.memory_space<vmem>>, %arg4: memref<128x128xf32, #tpu.memory_space<vmem>>, %arg5: memref<1x128xf32, #tpu.memory_space<vmem>>, %arg6: memref<128x128xf32, #tpu.memory_space<vmem>>, %arg7: memref<1x128xf32, #tpu.memory_space<vmem>>, %arg8: memref<1xf32, #tpu.memory_space<smem>>, %arg9: memref<16x128xf32, #tpu.memory_space<vmem>>) attributes {dimension_semantics = [#tpu.dimension_semantics<parallel>], iteration_bounds = array<i64: 1>, scalar_prefetch = 0 : i64, scratch_operands = 0 : i64, tpu.core_type = #tpu.core_type<tc>, window_params = [{transform_indices = @transform_0, window_bounds = array<i64: 16, 128>}, {pipeline_mode = #tpu.pipeline_mode<synchronous>, transform_indices = @transform_1, window_bounds = array<i64: 1, 128>}, {pipeline_mode = #tpu.pipeline_mode<synchronous>, transform_indices = @transform_2, window_bounds = array<i64: 1, 128>}, {pipeline_mode = #tpu.pipeline_mode<synchronous>, transform_indices = @transform_3, window_bounds = array<i64: 128, 128>}, {pipeline_mode = #tpu.pipeline_mode<synchronous>, transform_indices = @transform_4, window_bounds = array<i64: 1, 128>}, {pipeline_mode = #tpu.pipeline_mode<synchronous>, transform_indices = @transform_5, window_bounds = array<i64: 128, 128>}, {pipeline_mode = #tpu.pipeline_mode<synchronous>, transform_indices = @transform_6, window_bounds = array<i64: 1, 128>}, {transform_indices = @transform_7, window_bounds = array<i64: 1>}, {transform_indices = @transform_8, window_bounds = array<i64: 16, 128>}]} {
    %c0 = arith.constant 0 : index
    %c0_0 = arith.constant 0 : index
    %0 = vector.load %arg1[%c0, %c0_0] : memref<16x128xf32, #tpu.memory_space<vmem>>, vector<16x128xf32>
    %c0_1 = arith.constant 0 : index
    %c0_2 = arith.constant 0 : index
    %1 = vector.load %arg2[%c0_1, %c0_2] : memref<1x128xf32, #tpu.memory_space<vmem>>, vector<1x128xf32>
    %c0_3 = arith.constant 0 : index
    %c0_4 = arith.constant 0 : index
    %2 = vector.load %arg3[%c0_3, %c0_4] : memref<1x128xf32, #tpu.memory_space<vmem>>, vector<1x128xf32>
    %cst = arith.constant dense<0.000000e+00> : vector<16xf32>
    %3 = vector.multi_reduction <add>, %0, %cst [1] : vector<16x128xf32> to vector<16xf32>
    %4 = vector.shape_cast %3 : vector<16xf32> to vector<16x1xf32>
    %cst_5 = arith.constant 3.125000e-02 : f32
    %5 = vector.broadcast %cst_5 : f32 to vector<16x1xf32>
    %6 = arith.mulf %4, %5 : vector<16x1xf32>
    %7 = vector.broadcast %6 : vector<16x1xf32> to vector<16x128xf32>
    %8 = arith.subf %0, %7 : vector<16x128xf32>
    %9 = tpu.iota {dimensions = array<i32: 1>} : vector<16x128xi32>
    %c32_i32 = arith.constant 32 : i32
    %10 = vector.broadcast %c32_i32 : i32 to vector<16x128xi32>
    %11 = arith.cmpi slt, %9, %10 : vector<16x128xi32>
    %cst_6 = arith.constant 0.000000e+00 : f32
    %12 = vector.broadcast %cst_6 : f32 to vector<16x128xf32>
    %13 = arith.select %11, %8, %12 : vector<16x128xi1>, vector<16x128xf32>
    %14 = arith.mulf %13, %13 : vector<16x128xf32>
    %cst_7 = arith.constant dense<0.000000e+00> : vector<16xf32>
    %15 = vector.multi_reduction <add>, %14, %cst_7 [1] : vector<16x128xf32> to vector<16xf32>
    %16 = vector.shape_cast %15 : vector<16xf32> to vector<16x1xf32>
    %cst_8 = arith.constant 3.125000e-02 : f32
    %17 = vector.broadcast %cst_8 : f32 to vector<16x1xf32>
    %18 = arith.mulf %16, %17 : vector<16x1xf32>
    %cst_9 = arith.constant 9.99999974E-6 : f32
    %19 = vector.broadcast %cst_9 : f32 to vector<16x1xf32>
    %20 = arith.addf %18, %19 : vector<16x1xf32>
    %21 = math.rsqrt %20 : vector<16x1xf32>
    %22 = vector.broadcast %21 : vector<16x1xf32> to vector<16x128xf32>
    %23 = arith.mulf %8, %22 : vector<16x128xf32>
    %24 = vector.broadcast %1 : vector<1x128xf32> to vector<16x128xf32>
    %25 = arith.mulf %23, %24 : vector<16x128xf32>
    %26 = vector.broadcast %2 : vector<1x128xf32> to vector<16x128xf32>
    %27 = arith.addf %25, %26 : vector<16x128xf32>
    %c0_10 = arith.constant 0 : index
    %c0_11 = arith.constant 0 : index
    %28 = vector.load %arg4[%c0_10, %c0_11] : memref<128x128xf32, #tpu.memory_space<vmem>>, vector<128x128xf32>
    %cst_12 = arith.constant dense<0.000000e+00> : vector<16x128xf32>
    %29 = tpu.matmul %27, %28, %cst_12 {dimension_numbers = #tpu.dot_dimension_numbers<[1], [0], [0], [1], [0, 0, 1, 1], [], []>} : vector<16x128xf32>, vector<128x128xf32>, vector<16x128xf32> -> vector<16x128xf32>
    %c0_13 = arith.constant 0 : index
    %c0_14 = arith.constant 0 : index
    %30 = vector.load %arg5[%c0_13, %c0_14] : memref<1x128xf32, #tpu.memory_space<vmem>>, vector<1x128xf32>
    %31 = vector.broadcast %30 : vector<1x128xf32> to vector<16x128xf32>
    %32 = arith.addf %29, %31 : vector<16x128xf32>
    %cst_15 = arith.constant 0.000000e+00 : f32
    %33 = vector.broadcast %cst_15 : f32 to vector<16x128xf32>
    %34 = arith.maximumf %32, %33 : vector<16x128xf32>
    %c0_16 = arith.constant 0 : index
    %c0_17 = arith.constant 0 : index
    %35 = vector.load %arg6[%c0_16, %c0_17] : memref<128x128xf32, #tpu.memory_space<vmem>>, vector<128x128xf32>
    %cst_18 = arith.constant dense<0.000000e+00> : vector<16x128xf32>
    %36 = tpu.matmul %34, %35, %cst_18 {dimension_numbers = #tpu.dot_dimension_numbers<[1], [0], [0], [1], [0, 0, 1, 1], [], []>} : vector<16x128xf32>, vector<128x128xf32>, vector<16x128xf32> -> vector<16x128xf32>
    %c0_19 = arith.constant 0 : index
    %c0_20 = arith.constant 0 : index
    %37 = vector.load %arg7[%c0_19, %c0_20] : memref<1x128xf32, #tpu.memory_space<vmem>>, vector<1x128xf32>
    %38 = vector.broadcast %37 : vector<1x128xf32> to vector<16x128xf32>
    %39 = arith.addf %36, %38 : vector<16x128xf32>
    %c0_21 = arith.constant 0 : index
    %40 = memref.load %arg8[%c0_21] : memref<1xf32, #tpu.memory_space<smem>>
    %41 = vector.broadcast %40 : f32 to vector<16x128xf32>
    %42 = arith.mulf %39, %41 : vector<16x128xf32>
    %c0_22 = arith.constant 0 : index
    %c0_23 = arith.constant 0 : index
    %43 = vector.load %arg9[%c0_22, %c0_23] : memref<16x128xf32, #tpu.memory_space<vmem>>, vector<16x128xf32>
    tpu.vector_store %arg9[%c0_22, %c0_23], %42 {strides = array<i32>} : memref<16x128xf32, #tpu.memory_space<vmem>>, vector<16x128xf32>,
    return
  }
  func.func @transform_0(%arg0: i32) -> (i32, i32) {
    %c0_i32 = arith.constant 0 : i32
    %c0_i32_0 = arith.constant 0 : i32
    return %arg0, %c0_i32 : i32, i32
  }
  func.func @transform_1(%arg0: i32) -> (i32, i32) {
    %c0_i32 = arith.constant 0 : i32
    %c0_i32_0 = arith.constant 0 : i32
    %c0_i32_1 = arith.constant 0 : i32
    return %c0_i32, %c0_i32_0 : i32, i32
  }
  func.func @transform_2(%arg0: i32) -> (i32, i32) {
    %c0_i32 = arith.constant 0 : i32
    %c0_i32_0 = arith.constant 0 : i32
    %c0_i32_1 = arith.constant 0 : i32
    return %c0_i32, %c0_i32_0 : i32, i32
  }
  func.func @transform_3(%arg0: i32) -> (i32, i32) {
    %c0_i32 = arith.constant 0 : i32
    %c0_i32_0 = arith.constant 0 : i32
    %c0_i32_1 = arith.constant 0 : i32
    return %c0_i32, %c0_i32_0 : i32, i32
  }
  func.func @transform_4(%arg0: i32) -> (i32, i32) {
    %c0_i32 = arith.constant 0 : i32
    %c0_i32_0 = arith.constant 0 : i32
    %c0_i32_1 = arith.constant 0 : i32
    return %c0_i32, %c0_i32_0 : i32, i32
  }
  func.func @transform_5(%arg0: i32) -> (i32, i32) {
    %c0_i32 = arith.constant 0 : i32
    %c0_i32_0 = arith.constant 0 : i32
    %c0_i32_1 = arith.constant 0 : i32
    return %c0_i32, %c0_i32_0 : i32, i32
  }
  func.func @transform_6(%arg0: i32) -> (i32, i32) {
    %c0_i32 = arith.constant 0 : i32
    %c0_i32_0 = arith.constant 0 : i32
    %c0_i32_1 = arith.constant 0 : i32
    return %c0_i32, %c0_i32_0 : i32, i32
  }
  func.func @transform_7(%arg0: i32) -> i32 {
    %c0_i32 = arith.constant 0 : i32
    %c0_i32_0 = arith.constant 0 : i32
    return %c0_i32 : i32
  }
  func.func @transform_8(%arg0: i32) -> (i32, i32) {
    %c0_i32 = arith.constant 0 : i32
    %c0_i32_0 = arith.constant 0 : i32
    return %arg0, %c0_i32 : i32, i32
  }
}

</mosaic_0001>

<llo_original>
// kernel: tpu_custom_call.1
$region0: #{tpu_custom_call.1}
  #allocation0 [shape = 'u32[]', space=smem, size = 0x4, offset = 0x4, fixed_abs, tag = 'smem constant byte address 0x4 - core index']
  #allocation1 [shape = 'u32[144,128]{1,0:T(1,128)}', space=vmem, size = 0x12000, scoped, tag = 'internal scratch']
  #allocation2 [shape = 'f32[1]{0:T(128)S(6)}', space=smem, size = 0x200, scoped, tag = 'scoped memory for tpu_custom_call.1']
  %s0 = inlined_call_operand.hbm [shape: f32[16,128], index: 0, kind: input, shape index: {}]
  %s1 = inlined_call_operand.vmem [shape: f32[1,128], index: 1, kind: input, shape index: {}]
  %s2 = inlined_call_operand.vmem [shape: f32[1,128], index: 2, kind: input, shape index: {}]
  %s3 = inlined_call_operand.hbm [shape: f32[128,128], index: 3, kind: input, shape index: {}]
  %s4 = inlined_call_operand.vmem [shape: f32[1,128], index: 4, kind: input, shape index: {}]
  %s5 = inlined_call_operand.hbm [shape: f32[128,128], index: 5, kind: input, shape index: {}]
  %s6 = inlined_call_operand.vmem [shape: f32[1,128], index: 6, kind: input, shape index: {}]
  %s7 = inlined_call_operand.<no memory space> [shape: f32[1], index: 7, kind: input, shape index: {}]
  %s8 = inlined_call_operand.hbm [shape: f32[16,128], index: 8, kind: output, shape index: {}]
  %s9 = sld [smem:[#allocation0]]
  $region54: #{tpu_custom_call.1} parent=0
    _
  %s11 = ssub.s32 1, %s9
  %s12 = scalar_select 0, %s11, %s9
  %13 = sst [smem:[#allocation2]] %s7
  $region1: #{tpu_custom_call.1} parent=0
    #allocation3 [shape = 'u8[8192]{0}', space=vmem, size = 0x2000, scoped, tag = 'input window, operand 0, single buffered']
    #allocation4 [shape = 's32[1]{0}', space=sflag, size = 0x4, scoped, tag = 'scoped memory for tpu_custom_call.1']
    #allocation5 [shape = 's32[1]{0}', space=sflag, size = 0x4, scoped, tag = 'scoped memory for tpu_custom_call.1']
    #allocation6 [shape = 'u8[65536]{0}', space=vmem, size = 0x10000, scoped, tag = 'input window, operand 3, single buffered']
    #allocation7 [shape = 's32[1]{0}', space=sflag, size = 0x4, scoped, tag = 'scoped memory for tpu_custom_call.1']
    #allocation8 [shape = 'u8[65536]{0}', space=vmem, size = 0x10000, scoped, tag = 'input window, operand 5, single buffered']
    #allocation9 [shape = 'u8[8192]{0}', space=vmem, size = 0x2000, scoped, tag = 'output window, operand 0, single buffered']
    %14 = vsyncpa [#allocation4], 0
    %15 = vsyncpa [#allocation7], 0
    %16 = vsyncpa [#allocation5], 0
    // Predicated region
    $region2: #{tpu_custom_call.1} parent=1 // pred_check
      _
    $region3: #{tpu_custom_call.1} parent=1 // pred_check_branch
      %18 = sbr.rel (0) target = $region5
    $region4: #{tpu_custom_call.1} parent=1 // pred_region
      %s20 = ssub.s32 256, 256
      %21 = vsyncadd [#allocation4], %s20
      %s22 = sshll.u32 [#allocation3], 4
      %s23 = int_to_ptr.vmem [resolvable:$true] %s22
      %28 = dma.hbm_to_vmem [thread:$0]  %s0, 256, %s23, [#allocation4], 128, 128, 8
    $region5: #{tpu_custom_call.1} parent=1 // pred_fallthru
      _
    // Predicated region
    $region6: #{tpu_custom_call.1} parent=1 // pred_check
      _
    $region7: #{tpu_custom_call.1} parent=1 // pred_check_branch
      %30 = sbr.rel (0) target = $region9
    $region8: #{tpu_custom_call.1} parent=1 // pred_region
      _
    $region9: #{tpu_custom_call.1} parent=1 // pred_fallthru
      _
    // Predicated region
    $region10: #{tpu_custom_call.1} parent=1 // pred_check
      _
    $region11: #{tpu_custom_call.1} parent=1 // pred_check_branch
      %32 = sbr.rel (0) target = $region13
    $region12: #{tpu_custom_call.1} parent=1 // pred_region
      _
    $region13: #{tpu_custom_call.1} parent=1 // pred_fallthru
      _
    // Predicated region
    $region14: #{tpu_custom_call.1} parent=1 // pred_check
      _
    $region15: #{tpu_custom_call.1} parent=1 // pred_check_branch
      %34 = sbr.rel (0) target = $region17
    $region16: #{tpu_custom_call.1} parent=1 // pred_region
      %s36 = ssub.s32 2048, 2048
      %37 = vsyncadd [#allocation7], %s36
      %s38 = sshll.u32 [#allocation6], 4
      %s39 = int_to_ptr.vmem [resolvable:$true] %s38
      %44 = dma.hbm_to_vmem [thread:$0]  %s3, 2048, %s39, [#allocation7], 128, 128, 8
    $region17: #{tpu_custom_call.1} parent=1 // pred_fallthru
      _
    // Predicated region
    $region18: #{tpu_custom_call.1} parent=1 // pred_check
      _
    $region19: #{tpu_custom_call.1} parent=1 // pred_check_branch
      %46 = sbr.rel (0) target = $region21
    $region20: #{tpu_custom_call.1} parent=1 // pred_region
      _
    $region21: #{tpu_custom_call.1} parent=1 // pred_fallthru
      _
    // Predicated region
    $region22: #{tpu_custom_call.1} parent=1 // pred_check
      _
    $region23: #{tpu_custom_call.1} parent=1 // pred_check_branch
      %48 = sbr.rel (0) target = $region25
    $region24: #{tpu_custom_call.1} parent=1 // pred_region
      %s50 = ssub.s32 2048, 2048
      %51 = vsyncadd [#allocation7], %s50
      %s52 = sshll.u32 [#allocation8], 4
      %s53 = int_to_ptr.vmem [resolvable:$true] %s52
      %58 = dma.hbm_to_vmem [thread:$0]  %s5, 2048, %s53, [#allocation7], 128, 128, 8
    $region25: #{tpu_custom_call.1} parent=1 // pred_fallthru
      _
    // Predicated region
    $region26: #{tpu_custom_call.1} parent=1 // pred_check
      _
    $region27: #{tpu_custom_call.1} parent=1 // pred_check_branch
      %60 = sbr.rel (0) target = $region29
    $region28: #{tpu_custom_call.1} parent=1 // pred_region
      _
    $region29: #{tpu_custom_call.1} parent=1 // pred_fallthru
      _
    // Predicated region
    $region30: #{tpu_custom_call.1} parent=1 // pred_check
      _
    $region31: #{tpu_custom_call.1} parent=1 // pred_check_branch
      %62 = sbr.rel (0) target = $region33
    $region32: #{tpu_custom_call.1} parent=1 // pred_region
      _
    $region33: #{tpu_custom_call.1} parent=1 // pred_fallthru
      _
    // Predicated region
    $region34: #{tpu_custom_call.1} parent=1 // pred_check
      _
    $region35: #{tpu_custom_call.1} parent=1 // pred_check_branch
      %64 = sbr.rel (0) target = $region37
    $region36: #{tpu_custom_call.1} parent=1 // pred_region
      %65 = dma.done [#allocation4], 256
    $region37: #{tpu_custom_call.1} parent=1 // pred_fallthru
      _
    // Predicated region
    $region38: #{tpu_custom_call.1} parent=1 // pred_check
      _
    $region39: #{tpu_custom_call.1} parent=1 // pred_check_branch
      %67 = sbr.rel (0) target = $region41
    $region40: #{tpu_custom_call.1} parent=1 // pred_region
      %68 = dma.done [#allocation7], 2048
    $region41: #{tpu_custom_call.1} parent=1 // pred_fallthru
      _
    // Predicated region
    $region42: #{tpu_custom_call.1} parent=1 // pred_check
      _
    $region43: #{tpu_custom_call.1} parent=1 // pred_check_branch
      %70 = sbr.rel (0) target = $region45
    $region44: #{tpu_custom_call.1} parent=1 // pred_region
      %71 = dma.done [#allocation7], 2048
    $region45: #{tpu_custom_call.1} parent=1 // pred_fallthru
      _
    %v72 = vld [vmem:[#allocation3] sm:$0xff]
    %v73 = vld [vmem:[#allocation3 + $0x8] sm:$0xff]
    %v74 = vld [vmem:[%s1] sm:$0x1]
    %v75 = vld [vmem:[%s2] sm:$0x1]
    %76 = vadd.xlane.f32.xlu0 %v72
    %v77 = vpop.xlane.xlu0 %76
    %78 = vadd.xlane.f32.xlu0 %v73
    %v79 = vpop.xlane.xlu0 %78
    %v80 = vmul.f32 %v77, 0.03125
    %v81 = vmul.f32 %v79, 0.03125
    %v82 = vsub.f32 %v72, %v80
    %v83 = vsub.f32 %v73, %v81
    %v84 = vlaneseq
    %v85 = vand.u32 %v84, 127
    %vm86 = vcmp.lt.s32.totalorder %v85, 32
    %v87 = vsel %vm86, %v82, 0.0
    %v88 = vsel %vm86, %v83, 0.0
    %v89 = vmul.f32 %v87, %v87
    %v90 = vmul.f32 %v88, %v88
    %91 = vadd.xlane.f32.xlu0 %v89
    %v92 = vpop.xlane.xlu0 %91
    %93 = vadd.xlane.f32.xlu0 %v90
    %v94 = vpop.xlane.xlu0 %93
    %v95 = vmul.f32 %v92, 0.03125
    %v96 = vmul.f32 %v94, 0.03125
    %v97 = vadd.f32 %v95, 1e-05
    %v98 = vadd.f32 %v96, 1e-05
    %v99 = vrsqrt.pop %v97
    %v100 = vrsqrt.pop %v98
    %v101 = vmul.f32 %v82, %v99
    %v102 = vmul.f32 %v83, %v100
    %v104 = vlaneseq
    %v105 = vshrl.u32 %v104, 7
    %v106 = vsub.s32 0, %v105
    %v107 = vrot.slane %v74, %v106
    %v109 = vmul.f32 %v101, %v107
    %v110 = vmul.f32 %v102, %v107
    %v112 = vlaneseq
    %v113 = vshrl.u32 %v112, 7
    %v114 = vsub.s32 0, %v113
    %v115 = vrot.slane %v75, %v114
    %v117 = vadd.f32 %v109, %v115
    %v118 = vadd.f32 %v110, %v115
    %v119 = vld [vmem:[#allocation6] sm:$0xff]
    %v120 = vld [vmem:[#allocation6 + $0x8] sm:$0xff]
    %v121 = vld [vmem:[#allocation6 + $0x10] sm:$0xff]
    %v122 = vld [vmem:[#allocation6 + $0x18] sm:$0xff]
    %v123 = vld [vmem:[#allocation6 + $0x20] sm:$0xff]
    %v124 = vld [vmem:[#allocation6 + $0x28] sm:$0xff]
    %v125 = vld [vmem:[#allocation6 + $0x30] sm:$0xff]
    %v126 = vld [vmem:[#allocation6 + $0x38] sm:$0xff]
    %v127 = vld [vmem:[#allocation6 + $0x40] sm:$0xff]
    %v128 = vld [vmem:[#allocation6 + $0x48] sm:$0xff]
    %v129 = vld [vmem:[#allocation6 + $0x50] sm:$0xff]
    %v130 = vld [vmem:[#allocation6 + $0x58] sm:$0xff]
    %v131 = vld [vmem:[#allocation6 + $0x60] sm:$0xff]
    %v132 = vld [vmem:[#allocation6 + $0x68] sm:$0xff]
    %v133 = vld [vmem:[#allocation6 + $0x70] sm:$0xff]
    %v134 = vld [vmem:[#allocation6 + $0x78] sm:$0xff]
    %v135 = vld [vmem:[%s4] sm:$0x1]
    %v137 = vlaneseq
    %v138 = vshrl.u32 %v137, 7
    %v139 = vsub.s32 0, %v138
    %v140 = vrot.slane %v135, %v139
    %142 = vmatprep.subr.mxu0 0.0
    %143 = vmatpush1.msra.mxu0 %v134
    %144 = vmatprep.subr.mxu0 0.0
    %145 = vmatpush1.msra.mxu0 %v133
    %146 = vmatprep.subr.mxu0 0.0
    %147 = vmatpush1.msra.mxu0 %v132
    %148 = vmatprep.subr.mxu0 0.0
    %149 = vmatpush1.msra.mxu0 %v131
    %150 = vmatprep.subr.mxu0 0.0
    %151 = vmatpush1.msra.mxu0 %v130
    %152 = vmatprep.subr.mxu0 0.0
    %153 = vmatpush1.msra.mxu0 %v129
    %154 = vmatprep.subr.mxu0 0.0
    %155 = vmatpush1.msra.mxu0 %v128
    %156 = vmatprep.subr.mxu0 0.0
    %157 = vmatpush1.msra.mxu0 %v127
    %158 = vmatprep.subr.mxu0 0.0
    %159 = vmatpush1.msra.mxu0 %v126
    %160 = vmatprep.subr.mxu0 0.0
    %161 = vmatpush1.msra.mxu0 %v125
    %162 = vmatprep.subr.mxu0 0.0
    %163 = vmatpush1.msra.mxu0 %v124
    %164 = vmatprep.subr.mxu0 0.0
    %165 = vmatpush1.msra.mxu0 %v123
    %166 = vmatprep.subr.mxu0 0.0
    %167 = vmatpush1.msra.mxu0 %v122
    %168 = vmatprep.subr.mxu0 0.0
    %169 = vmatpush1.msra.mxu0 %v121
    %170 = vmatprep.subr.mxu0 0.0
    %171 = vmatpush1.msra.mxu0 %v120
    %172 = vmatprep.subr.mxu0 0.0
    %173 = vmatpush1.msra.mxu0 %v119
    %174 = vmatprep.subr.mxu0 0.0
    %175 = vmatpush2.msra.mxu0 0.0
    %176 = vmatprep.subr.mxu0 0.0
    %177 = vmatpush2.msra.mxu0 0.0
    %178 = vmatprep.subr.mxu0 0.0
    %179 = vmatpush2.msra.mxu0 0.0
    %180 = vmatprep.subr.mxu0 0.0
    %181 = vmatpush2.msra.mxu0 0.0
    %182 = vmatprep.subr.mxu0 0.0
    %183 = vmatpush2.msra.mxu0 0.0
    %184 = vmatprep.subr.mxu0 0.0
    %185 = vmatpush2.msra.mxu0 0.0
    %186 = vmatprep.subr.mxu0 0.0
    %187 = vmatpush2.msra.mxu0 0.0
    %188 = vmatprep.subr.mxu0 0.0
    %189 = vmatpush2.msra.mxu0 0.0
    %190 = vmatprep.subr.mxu0 0.0
    %191 = vmatpush2.msra.mxu0 0.0
    %192 = vmatprep.subr.mxu0 0.0
    %193 = vmatpush2.msra.mxu0 0.0
    %194 = vmatprep.subr.mxu0 0.0
    %195 = vmatpush2.msra.mxu0 0.0
    %196 = vmatprep.subr.mxu0 0.0
    %197 = vmatpush2.msra.mxu0 0.0
    %198 = vmatprep.subr.mxu0 0.0
    %199 = vmatpush2.msra.mxu0 0.0
    %200 = vmatprep.subr.mxu0 0.0
    %201 = vmatpush2.msra.mxu0 0.0
    %202 = vmatprep.subr.mxu0 0.0
    %203 = vmatpush2.msra.mxu0 0.0
    %204 = vmatprep.subr.mxu0 0.0
    %205 = vmatpush2.msra.mxu0 0.0
    %206 = vmatprep.mubr.f32.mxu0 0.0
    %207 = vmatmul.mubr.f32.gmra.mxu0 %v117
    %v208 = vpop.f32.mrf.mxu0
    %v209 = vadd.f32 %v140, %v208
    %v210 = vpop.f32.mrf.mxu0
    %211 = vmatprep.mubr.f32.mxu0 0.0
    %212 = vmatmul.mubr.f32.gmra.mxu0 %v118
    %v213 = vpop.f32.mrf.mxu0
    %v214 = vadd.f32 %v140, %v213
    %v215 = vpop.f32.mrf.mxu0
    %216 = vdwg.mxu0
    %v217 = vmax.f32 %v209, 0.0
    %v218 = vmax.f32 %v214, 0.0
    %v219 = vld [vmem:[#allocation8] sm:$0xff]
    %v220 = vld [vmem:[#allocation8 + $0x8] sm:$0xff]
    %v221 = vld [vmem:[#allocation8 + $0x10] sm:$0xff]
    %v222 = vld [vmem:[#allocation8 + $0x18] sm:$0xff]
    %v223 = vld [vmem:[#allocation8 + $0x20] sm:$0xff]
    %v224 = vld [vmem:[#allocation8 + $0x28] sm:$0xff]
    %v225 = vld [vmem:[#allocation8 + $0x30] sm:$0xff]
    %v226 = vld [vmem:[#allocation8 + $0x38] sm:$0xff]
    %v227 = vld [vmem:[#allocation8 + $0x40] sm:$0xff]
    %v228 = vld [vmem:[#allocation8 + $0x48] sm:$0xff]
    %v229 = vld [vmem:[#allocation8 + $0x50] sm:$0xff]
    %v230 = vld [vmem:[#allocation8 + $0x58] sm:$0xff]
    %v231 = vld [vmem:[#allocation8 + $0x60] sm:$0xff]
    %v232 = vld [vmem:[#allocation8 + $0x68] sm:$0xff]
    %v233 = vld [vmem:[#allocation8 + $0x70] sm:$0xff]
    %v234 = vld [vmem:[#allocation8 + $0x78] sm:$0xff]
    %v235 = vld [vmem:[%s6] sm:$0x1]
    %v237 = vlaneseq
    %v238 = vshrl.u32 %v237, 7
    %v239 = vsub.s32 0, %v238
    %v240 = vrot.slane %v235, %v239
    %242 = vmatprep.subr.mxu0 0.0
    %243 = vmatpush1.msra.mxu0 %v234
    %244 = vmatprep.subr.mxu0 0.0
    %245 = vmatpush1.msra.mxu0 %v233
    %246 = vmatprep.subr.mxu0 0.0
    %247 = vmatpush1.msra.mxu0 %v232
    %248 = vmatprep.subr.mxu0 0.0
    %249 = vmatpush1.msra.mxu0 %v231
    %250 = vmatprep.subr.mxu0 0.0
    %251 = vmatpush1.msra.mxu0 %v230
    %252 = vmatprep.subr.mxu0 0.0
    %253 = vmatpush1.msra.mxu0 %v229
    %254 = vmatprep.subr.mxu0 0.0
    %255 = vmatpush1.msra.mxu0 %v228
    %256 = vmatprep.subr.mxu0 0.0
    %257 = vmatpush1.msra.mxu0 %v227
    %258 = vmatprep.subr.mxu0 0.0
    %259 = vmatpush1.msra.mxu0 %v226
    %260 = vmatprep.subr.mxu0 0.0
    %261 = vmatpush1.msra.mxu0 %v225
    %262 = vmatprep.subr.mxu0 0.0
    %263 = vmatpush1.msra.mxu0 %v224
    %264 = vmatprep.subr.mxu0 0.0
    %265 = vmatpush1.msra.mxu0 %v223
    %266 = vmatprep.subr.mxu0 0.0
    %267 = vmatpush1.msra.mxu0 %v222
    %268 = vmatprep.subr.mxu0 0.0
    %269 = vmatpush1.msra.mxu0 %v221
    %270 = vmatprep.subr.mxu0 0.0
    %271 = vmatpush1.msra.mxu0 %v220
    %272 = vmatprep.subr.mxu0 0.0
    %273 = vmatpush1.msra.mxu0 %v219
    %274 = vmatprep.subr.mxu0 0.0
    %275 = vmatpush2.msra.mxu0 0.0
    %276 = vmatprep.subr.mxu0 0.0
    %277 = vmatpush2.msra.mxu0 0.0
    %278 = vmatprep.subr.mxu0 0.0
    %279 = vmatpush2.msra.mxu0 0.0
    %280 = vmatprep.subr.mxu0 0.0
    %281 = vmatpush2.msra.mxu0 0.0
    %282 = vmatprep.subr.mxu0 0.0
    %283 = vmatpush2.msra.mxu0 0.0
    %284 = vmatprep.subr.mxu0 0.0
    %285 = vmatpush2.msra.mxu0 0.0
    %286 = vmatprep.subr.mxu0 0.0
    %287 = vmatpush2.msra.mxu0 0.0
    %288 = vmatprep.subr.mxu0 0.0
    %289 = vmatpush2.msra.mxu0 0.0
    %290 = vmatprep.subr.mxu0 0.0
    %291 = vmatpush2.msra.mxu0 0.0
    %292 = vmatprep.subr.mxu0 0.0
    %293 = vmatpush2.msra.mxu0 0.0
    %294 = vmatprep.subr.mxu0 0.0
    %295 = vmatpush2.msra.mxu0 0.0
    %296 = vmatprep.subr.mxu0 0.0
    %297 = vmatpush2.msra.mxu0 0.0
    %298 = vmatprep.subr.mxu0 0.0
    %299 = vmatpush2.msra.mxu0 0.0
    %300 = vmatprep.subr.mxu0 0.0
    %301 = vmatpush2.msra.mxu0 0.0
    %302 = vmatprep.subr.mxu0 0.0
    %303 = vmatpush2.msra.mxu0 0.0
    %304 = vmatprep.subr.mxu0 0.0
    %305 = vmatpush2.msra.mxu0 0.0
    %306 = vmatprep.mubr.f32.mxu0 0.0
    %307 = vmatmul.mubr.f32.gmra.mxu0 %v217
    %v308 = vpop.f32.mrf.mxu0
    %v309 = vadd.f32 %v240, %v308
    %v310 = vpop.f32.mrf.mxu0
    %311 = vmatprep.mubr.f32.mxu0 0.0
    %312 = vmatmul.mubr.f32.gmra.mxu0 %v218
    %v313 = vpop.f32.mrf.mxu0
    %v314 = vadd.f32 %v240, %v313
    %v315 = vpop.f32.mrf.mxu0
    %316 = vdwg.mxu0
    %s317 = sld [smem:[#allocation2]]
    %v318 = vstv %s317
    %v319 = vmul.f32 %v309, %v318
    %v320 = vmul.f32 %v314, %v318
    %321 = vst [vmem:[#allocation9] sm:$0xff] %v319
    %322 = vst [vmem:[#allocation9 + $0x8] sm:$0xff] %v320
    // Predicated region
    $region46: #{tpu_custom_call.1} parent=1 // pred_check
      _
    $region47: #{tpu_custom_call.1} parent=1 // pred_check_branch
      %324 = sbr.rel (0) target = $region49
    $region48: #{tpu_custom_call.1} parent=1 // pred_region
      %s326 = ssub.s32 256, 256
      %327 = vsyncadd [#allocation5], %s326
      %s328 = sshll.u32 [#allocation9], 4
      %s329 = int_to_ptr.vmem [resolvable:$true] %s328
      %334 = dma.vmem_to_hbm [thread:$0]  %s329, 256, %s8, [#allocation5], 128, 128, 8
    $region49: #{tpu_custom_call.1} parent=1 // pred_fallthru
      _
    // Predicated region
    $region50: #{tpu_custom_call.1} parent=1 // pred_check
      _
    $region51: #{tpu_custom_call.1} parent=1 // pred_check_branch
      %336 = sbr.rel (0) target = $region53
    $region52: #{tpu_custom_call.1} parent=1 // pred_region
      %337 = dma.done [#allocation5], 256
    $region53: #{tpu_custom_call.1} parent=1 // pred_fallthru
      _
    %338 = vsyncpa [#allocation4], 1
    %339 = vsyncpa [#allocation7], 1
    %340 = vsyncpa [#allocation5], 1

</llo_original>
